<compile_context>
chip_gen: v7x
topology: tpu7x:2x2x1
jax: 0.10.0
libtpu: 0.0.40
codegen_flags: <defaults>
</compile_context>

<pallas_src>
import math

import numpy as np
import jax
import jax.numpy as jnp
from jax.experimental import pallas as pl
from jax.experimental.pallas import tpu as pltpu

ACT_DTYPE = jnp.bfloat16        # matmul operand / activation dtype
COUT_TILE = 256                 # MXU-aligned output-channel tile
VMEM_LIMIT = 48 * 1024 * 1024   # above scoped default, below physical


# ----------------------------------------------------------------------------
# Pallas kernels
# ----------------------------------------------------------------------------
def _make_conv_kernel(taps, mo, relu, with_res):
    """Implicit-GEMM conv: out = act(sum_t A_t @ W_t + b [+ R]).

    taps: static list of (plane_index, row_offset) describing where each
          kernel tap's activation rows live inside the flattened input slab.
    """
    def kernel(x_ref, w_ref, b_ref, *rest):
        if with_res:
            r_ref, o_ref = rest
        else:
            (o_ref,) = rest
        acc = None
        for t, (p, off) in enumerate(taps):
            a = x_ref[0, p, off:off + mo, :]                     # (mo, Cin) bf16
            c = jnp.dot(a, w_ref[t], preferred_element_type=jnp.float32)
            acc = c if acc is None else acc + c
        out = acc + b_ref[...]                                   # f32 epilogue
        if with_res:
            out = out + r_ref[0].astype(jnp.float32)
        if relu:
            out = jnp.maximum(out, 0.0)
        o_ref[0] = out.astype(o_ref.dtype)
    return kernel


def _conv_pallas(planes, w, b, taps, mo, *, relu, residual=None):
    """planes:(N,P,Mi,Cin) bf16, w:(T,Cin,Cout) bf16, b:(1,Cout) f32."""
    n, p, mi, cin = planes.shape
    t, _, cout = w.shape
    tco = cout if cout <= COUT_TILE else COUT_TILE
    assert cout % tco == 0

    in_specs = [
        pl.BlockSpec((1, p, mi, cin), lambda i, j: (i, 0, 0, 0)),
        pl.BlockSpec((t, cin, tco), lambda i, j: (0, 0, j)),
        pl.BlockSpec((1, tco), lambda i, j: (0, j)),
    ]
    args = [planes, w, b]
    if residual is not None:
        in_specs.append(pl.BlockSpec((1, mo, tco), lambda i, j: (i, 0, j)))
        args.append(residual)

    return pl.pallas_call(
        _make_conv_kernel(taps, mo, relu, residual is not None),
        out_shape=jax.ShapeDtypeStruct((n, mo, cout), ACT_DTYPE),
        grid_spec=pltpu.PrefetchScalarGridSpec(
            num_scalar_prefetch=0,
            grid=(n, cout // tco),
            in_specs=in_specs,
            out_specs=pl.BlockSpec((1, mo, tco), lambda i, j: (i, 0, j)),
        ),
        compiler_params=pltpu.CompilerParams(
            dimension_semantics=("parallel", "parallel"),
            vmem_limit_bytes=VMEM_LIMIT),
    )(*args)


def _make_pool_kernel(taps, mo):
    def kernel(x_ref, o_ref):
        m = None
        for (p, off) in taps:
            v = x_ref[0, p, off:off + mo, :]
            m = v if m is None else jnp.maximum(m, v)
        o_ref[0] = m
    return kernel


def _pool_pallas(planes, taps, mo):
    n, p, mi, c = planes.shape
    return pl.pallas_call(
        _make_pool_kernel(taps, mo),
        out_shape=jax.ShapeDtypeStruct((n, mo, c), planes.dtype),
        grid_spec=pltpu.PrefetchScalarGridSpec(
            num_scalar_prefetch=0,
            grid=(n,),
            in_specs=[pl.BlockSpec((1, p, mi, c), lambda i: (i, 0, 0, 0))],
            out_specs=pl.BlockSpec((1, mo, c), lambda i: (i, 0, 0)),
        ),
        compiler_params=pltpu.CompilerParams(
            dimension_semantics=("parallel",),
            vmem_limit_bytes=VMEM_LIMIT),
    )(planes)


# ----------------------------------------------------------------------------
# Plain-JAX glue: build the flattened / parity-folded activation slabs.
# (All reshapes below are contiguous splits/merges -> free; the only copies
#  are the spatial zero-pad, the parity transpose for stride-2 convs, and
#  the final junk-column strip, each ~1x the activation.)
# ----------------------------------------------------------------------------
def _prep_stride1(x, k, pad):
    n, h, w, c = x.shape
    ho = h + 2 * pad - k + 1
    wo = w + 2 * pad - k + 1
    hp = h + 2 * pad + 1          # one extra bottom row: keeps junk reads in range
    wp = w + 2 * pad
    xp = jnp.pad(x, ((0, 0), (pad, pad + 1), (pad, pad), (0, 0)))
    planes = xp.reshape(n, 1, hp * wp, c)
    taps = [(0, di * wp + dj) for di in range(k) for dj in range(k)]
    return planes, taps, ho * wp, ho, wo, wp


def _prep_stride2(x, k, pad, pad_value=0.0):
    """Generic stride-2 parity fold: 4 planes, one tap per (di, dj)."""
    n, h, w, c = x.shape
    assert h % 2 == 0 and w % 2 == 0, "stride-2 fold expects even spatial dims"
    ho = (h + 2 * pad - k) // 2 + 1
    wo = (w + 2 * pad - k) // 2 + 1
    hp = h + 2 * pad + 2          # two extra bottom rows (one folded row of slack)
    wp = w + 2 * pad
    xp = jnp.pad(x, ((0, 0), (pad, pad + 2), (pad, pad), (0, 0)),
                 constant_values=pad_value)
    hf, wf = hp // 2, wp // 2
    x6 = xp.reshape(n, hf, 2, wf, 2, c)
    planes = x6.transpose(0, 2, 4, 1, 3, 5).reshape(n, 4, hf * wf, c)
    taps = [((di % 2) * 2 + (dj % 2), (di // 2) * wf + (dj // 2))
            for di in range(k) for dj in range(k)]
    return planes, taps, ho * wf, ho, wo, wf


def _prep_stride2_merged(x, k, pad):
    """Space-to-depth stride-2 fold: parity planes merged into channels.

    Produces one plane of shape (hf*wf, 4*Cin) and ceil(k/2)^2 taps -> far
    fewer MXU matmuls when Cin is tiny (the 7x7/s2 stem, Cin=3)."""
    n, h, w, c = x.shape
    assert h % 2 == 0 and w % 2 == 0, "stride-2 fold expects even spatial dims"
    kf = (k + 1) // 2
    ho = (h + 2 * pad - k) // 2 + 1
    wo = (w + 2 * pad - k) // 2 + 1
    hp = h + 2 * pad + 2
    wp = w + 2 * pad
    xp = jnp.pad(x, ((0, 0), (pad, pad + 2), (pad, pad), (0, 0)))
    hf, wf = hp // 2, wp // 2
    x6 = xp.reshape(n, hf, 2, wf, 2, c)
    # channel layout: (row_parity, col_parity, cin) -> 4*Cin
    planes = x6.transpose(0, 1, 3, 2, 4, 5).reshape(n, 1, hf * wf, 4 * c)
    taps = [(0, r * wf + s) for r in range(kf) for s in range(kf)]
    return planes, taps, ho * wf, ho, wo, wf


def _merge_stride2_weight(w_flat, k, cin):
    """(k*k, Cin, Cout) -> (ceil(k/2)^2, 4*Cin, Cout) matching the merged
    activation channel layout; out-of-kernel taps are zero-padded."""
    kf = (k + 1) // 2
    cout = w_flat.shape[-1]
    w4 = w_flat.reshape(k, k, cin, cout)
    w4 = jnp.pad(w4, ((0, 2 * kf - k), (0, 2 * kf - k), (0, 0), (0, 0)))
    w6 = w4.reshape(kf, 2, kf, 2, cin, cout).transpose(0, 2, 1, 3, 4, 5)
    return w6.reshape(kf * kf, 4 * cin, cout)


def conv_layer(x, pw, *, ksize, stride, pad, relu, residual=None):
    """x:(N,H,W,Cin) bf16.  pw = {'w': (k*k,Cin,Cout) bf16, 'b': (1,Cout) f32}."""
    n = x.shape[0]
    cin = x.shape[3]
    cout = pw['w'].shape[-1]

    if ksize == 1:
        if stride != 1:
            x = x[:, ::stride, ::stride, :]
        nh, nw = x.shape[1], x.shape[2]
        mo = nh * nw
        planes = x.reshape(n, 1, mo, x.shape[3])
        r = None if residual is None else residual.reshape(n, mo, cout)
        out = _conv_pallas(planes, pw['w'], pw['b'], [(0, 0)], mo,
                           relu=relu, residual=r)
        return out.reshape(n, nh, nw, cout)

    assert residual is None
    if stride == 1:
        planes, taps, mo, ho, wo, wf = _prep_stride1(x, ksize, pad)
        w_use = pw['w']
    elif 4 * cin <= 128:
        # small-Cin stride-2 conv (the 7x7 stem): space-to-depth merged path
        planes, taps, mo, ho, wo, wf = _prep_stride2_merged(x, ksize, pad)
        w_use = _merge_stride2_weight(pw['w'], ksize, cin)
    else:
        planes, taps, mo, ho, wo, wf = _prep_stride2(x, ksize, pad)
        w_use = pw['w']
    out = _conv_pallas(planes, w_use, pw['b'], taps, mo, relu=relu)
    # strip the junk columns introduced by flattening padded rows
    return out.reshape(n, ho, wf, cout)[:, :, :wo, :]


def maxpool_3x3_s2_p1(x):
    n, _, _, c = x.shape
    planes, taps, mo, ho, wo, wf = _prep_stride2(x, 3, 1, pad_value=-jnp.inf)
    out = _pool_pallas(planes, taps, mo)
    return out.reshape(n, ho, wf, c)[:, :, :wo, :]


# ----------------------------------------------------------------------------
# ResNet-50 structure
# ----------------------------------------------------------------------------
LAYER_CFG = [(64, 3, 1), (128, 4, 2), (256, 6, 2), (512, 3, 2)]  # (planes, blocks, stride)


def _conv_params(key, k, cin, cout):
    std = math.sqrt(2.0 / (k * k * cout))  # matches ResNet.init_weights
    w = std * jax.random.normal(key, (k, k, cin, cout), jnp.float32)
    b = jnp.zeros((cout,), jnp.float32)
    return w, b


def _prepack(w, b):
    """One-time weight prepack into the kernel's (taps, Cin, Cout) bf16 layout."""
    k, _, cin, cout = w.shape
    return {'w': w.reshape(k * k, cin, cout).astype(ACT_DTYPE),
            'b': b.reshape(1, cout).astype(jnp.float32)}


def make_params(key):
    params = {}
    key, k0 = jax.random.split(key)
    params['stem'] = _prepack(*_conv_params(k0, 7, 3, 64))
    inplanes = 64
    layers = []
    for planes, blocks, stride in LAYER_CFG:
        bl = []
        for bi in range(blocks):
            s = stride if bi == 0 else 1
            key, k1, k2, k3, k4 = jax.random.split(key, 5)
            bp = {'c1': _prepack(*_conv_params(k1, 1, inplanes, planes)),
                  'c2': _prepack(*_conv_params(k2, 3, planes, planes)),
                  'c3': _prepack(*_conv_params(k3, 1, planes, planes * 4))}
            if bi == 0 and (s != 1 or inplanes != planes * 4):
                bp['down'] = _prepack(*_conv_params(k4, 1, inplanes, planes * 4))
            bl.append(bp)
            inplanes = planes * 4
        layers.append(bl)
    params['layers'] = layers
    return params


def bottleneck(x, bp, stride):
    out = conv_layer(x, bp['c1'], ksize=1, stride=1, pad=0, relu=True)
    out = conv_layer(out, bp['c2'], ksize=3, stride=stride, pad=1, relu=True)
    if 'down' in bp:
        residual = conv_layer(x, bp['down'], ksize=1, stride=stride, pad=0, relu=False)
    else:
        residual = x
    # conv3 (1x1) with fused residual add + final ReLU
    out = conv_layer(out, bp['c3'], ksize=1, stride=1, pad=0, relu=True,
                     residual=residual)
    return out


def resnet50_forward(params, x_nchw):
    x = jnp.transpose(x_nchw, (0, 2, 3, 1)).astype(ACT_DTYPE)   # NCHW -> NHWC bf16
    x = conv_layer(x, params['stem'], ksize=7, stride=2, pad=3, relu=True)  # features[0]
    x = maxpool_3x3_s2_p1(x)                                                # features[1]
    res = []
    for li, (planes, blocks, stride) in enumerate(LAYER_CFG):               # features[2..5]
        for bi in range(blocks):
            s = stride if bi == 0 else 1
            x = bottleneck(x, params['layers'][li][bi], s)
        if li >= 1:  # out_indices = [3, 4, 5] -> layer2, layer3, layer4
            res.append(jnp.transpose(x, (0, 3, 1, 2)).astype(jnp.float32))  # NCHW f32
    return res


# ----------------------------------------------------------------------------
# Self-checks of the implicit-GEMM kernels against lax references
# ----------------------------------------------------------------------------
def _ref_conv(x, w, b, stride, pad, relu, residual=None):
    out = jax.lax.conv_general_dilated(
        x.astype(jnp.float32), w.astype(jnp.float32),
        window_strides=(stride, stride),
        padding=((pad, pad), (pad, pad)),
        dimension_numbers=('NHWC', 'HWIO', 'NHWC'),
        precision=jax.lax.Precision.HIGHEST)
    out = out + b.reshape(1, 1, 1, -1).astype(jnp.float32)
    if residual is not None:
        out = out + residual.astype(jnp.float32)
    if relu:
        out = jnp.maximum(out, 0.0)
    return out


def _check_conv(key, n, h, w, cin, cout, k, stride, pad, relu, with_res):
    k1, k2, k3, k4 = jax.random.split(key, 4)
    x = jax.random.normal(k1, (n, h, w, cin), jnp.float32).astype(ACT_DTYPE)
    wt = (0.1 * jax.random.normal(k2, (k, k, cin, cout), jnp.float32))
    wt = wt.astype(ACT_DTYPE).astype(jnp.float32)   # quantize so operands match
    b = 0.1 * jax.random.normal(k3, (cout,), jnp.float32)
    ho = (h + 2 * pad - k) // stride + 1
    wo = (w + 2 * pad - k) // stride + 1
    res = None
    if with_res:
        res = jax.random.normal(k4, (n, ho, wo, cout), jnp.float32).astype(ACT_DTYPE)
    pw = {'w': wt.reshape(k * k, cin, cout).astype(ACT_DTYPE),
          'b': b.reshape(1, cout)}
    got = conv_layer(x, pw, ksize=k, stride=stride, pad=pad, relu=relu,
                     residual=res).astype(jnp.float32)
    want = _ref_conv(x, wt, b, stride, pad, relu, residual=res)
    np.testing.assert_allclose(got, want, rtol=3e-2, atol=3e-2)


def _check_pool(key):
    x = jax.random.normal(key, (2, 16, 16, 64), jnp.float32).astype(ACT_DTYPE)
    got = maxpool_3x3_s2_p1(x).astype(jnp.float32)
    want = jax.lax.reduce_window(
        x.astype(jnp.float32), -jnp.inf, jax.lax.max,
        (1, 3, 3, 1), (1, 2, 2, 1), ((0, 0), (1, 1), (1, 1), (0, 0)))
    np.testing.assert_allclose(got, want, rtol=1e-6, atol=1e-6)


if __name__ == "__main__":
    key = jax.random.PRNGKey(0)

    # unit checks: every conv/pool code path vs. a lax reference
    ck = jax.random.split(key, 7)
    _check_conv(ck[0], 2, 8, 8, 64, 128, 1, 1, 0, True, True)     # 1x1 + residual + relu
    _check_conv(ck[1], 2, 8, 8, 64, 128, 1, 2, 0, False, False)   # 1x1 stride-2 downsample
    _check_conv(ck[2], 2, 8, 8, 32, 64, 3, 1, 1, True, False)     # 3x3 stride 1
    _check_conv(ck[3], 2, 8, 8, 32, 64, 3, 2, 1, True, False)     # 3x3 stride 2 (merged path)
    _check_conv(ck[4], 2, 8, 8, 128, 64, 3, 2, 1, True, False)    # 3x3 stride 2 (generic path)
    _check_conv(ck[5], 2, 16, 16, 3, 64, 7, 2, 3, True, False)    # 7x7 stride-2 stem (merged)
    _check_pool(ck[6])                                            # maxpool 3x3/s2/p1

    pkey, xkey = jax.random.split(key)
    params = make_params(pkey)
    x = jax.random.normal(xkey, (2, 3, 32, 32), jnp.float32)      # small NCHW input

    fwd = jax.jit(resnet50_forward)
    outs = jax.block_until_ready(fwd(params, x))

    assert outs[0].shape == (2, 512, 4, 4)
    assert outs[1].shape == (2, 1024, 2, 2)
    assert outs[2].shape == (2, 2048, 1, 1)
    assert all(bool(jnp.all(jnp.isfinite(o))) for o in outs)
    print("KERNEL_OK")
</pallas_src>

<mosaic_0001>
module attributes {stable_mosaic.version = 11 : i64} {
  func.func @kernel(%arg0: i32, %arg1: i32, %arg2: memref<1x1x64x64xbf16, #tpu.memory_space<vmem>>, %arg3: memref<1x64x128xbf16, #tpu.memory_space<vmem>>, %arg4: memref<1x128xf32, #tpu.memory_space<vmem>>, %arg5: memref<1x64x128xbf16, #tpu.memory_space<vmem>>, %arg6: memref<1x64x128xbf16, #tpu.memory_space<vmem>>) attributes {dimension_semantics = [#tpu.dimension_semantics<parallel>, #tpu.dimension_semantics<parallel>], iteration_bounds = array<i64: 2, 1>, scalar_prefetch = 0 : i64, scratch_operands = 0 : i64, tpu.core_type = #tpu.core_type<tc>, window_params = [{transform_indices = @transform_0, window_bounds = array<i64: 1, 1, 64, 64>}, {transform_indices = @transform_1, window_bounds = array<i64: 1, 64, 128>}, {transform_indices = @transform_2, window_bounds = array<i64: 1, 128>}, {transform_indices = @transform_3, window_bounds = array<i64: 1, 64, 128>}, {transform_indices = @transform_4, window_bounds = array<i64: 1, 64, 128>}]} {
    %c0 = arith.constant 0 : index
    %c0_0 = arith.constant 0 : index
    %c0_1 = arith.constant 0 : index
    %c0_2 = arith.constant 0 : index
    %0 = vector.load %arg2[%c0, %c0_0, %c0_1, %c0_2] : memref<1x1x64x64xbf16, #tpu.memory_space<vmem>>, vector<1x1x64x64xbf16>
    %1 = vector.shape_cast %0 : vector<1x1x64x64xbf16> to vector<64x64xbf16>
    %c0_3 = arith.constant 0 : index
    %c0_4 = arith.constant 0 : index
    %c0_5 = arith.constant 0 : index
    %2 = vector.load %arg3[%c0_3, %c0_4, %c0_5] : memref<1x64x128xbf16, #tpu.memory_space<vmem>>, vector<1x64x128xbf16>
    %3 = vector.shape_cast %2 : vector<1x64x128xbf16> to vector<64x128xbf16>
    %cst = arith.constant dense<0.000000e+00> : vector<64x128xf32>
    %4 = tpu.matmul %1, %3, %cst {dimension_numbers = #tpu.dot_dimension_numbers<[1], [0], [0], [1], [0, 0, 1, 1], [], []>} : vector<64x64xbf16>, vector<64x128xbf16>, vector<64x128xf32> -> vector<64x128xf32>
    %c0_6 = arith.constant 0 : index
    %c0_7 = arith.constant 0 : index
    %5 = vector.load %arg4[%c0_6, %c0_7] : memref<1x128xf32, #tpu.memory_space<vmem>>, vector<1x128xf32>
    %6 = vector.broadcast %5 : vector<1x128xf32> to vector<64x128xf32>
    %7 = arith.addf %4, %6 : vector<64x128xf32>
    %c0_8 = arith.constant 0 : index
    %c0_9 = arith.constant 0 : index
    %c0_10 = arith.constant 0 : index
    %8 = vector.load %arg5[%c0_8, %c0_9, %c0_10] : memref<1x64x128xbf16, #tpu.memory_space<vmem>>, vector<1x64x128xbf16>
    %9 = vector.shape_cast %8 : vector<1x64x128xbf16> to vector<64x128xbf16>
    %10 = arith.extf %9 : vector<64x128xbf16> to vector<64x128xf32>
    %11 = arith.addf %7, %10 : vector<64x128xf32>
    %cst_11 = arith.constant 0.000000e+00 : f32
    %12 = vector.broadcast %cst_11 : f32 to vector<64x128xf32>
    %13 = arith.maximumf %11, %12 : vector<64x128xf32>
    %14 = arith.truncf %13 : vector<64x128xf32> to vector<64x128xbf16>
    %c0_12 = arith.constant 0 : index
    %c0_13 = arith.constant 0 : index
    %c0_14 = arith.constant 0 : index
    %15 = vector.load %arg6[%c0_12, %c0_13, %c0_14] : memref<1x64x128xbf16, #tpu.memory_space<vmem>>, vector<1x64x128xbf16>
    %16 = vector.shape_cast %15 : vector<1x64x128xbf16> to vector<64x128xbf16>
    %17 = vector.shape_cast %14 : vector<64x128xbf16> to vector<1x64x128xbf16>
    tpu.vector_store %arg6[%c0_12, %c0_13, %c0_14], %17 {strides = array<i32>} : memref<1x64x128xbf16, #tpu.memory_space<vmem>>, vector<1x64x128xbf16>,
    return
  }
  func.func @transform_0(%arg0: i32, %arg1: i32) -> (i32, i32, i32, i32) {
    %c0_i32 = arith.constant 0 : i32
    %c0_i32_0 = arith.constant 0 : i32
    %c0_i32_1 = arith.constant 0 : i32
    %c0_i32_2 = arith.constant 0 : i32
    return %arg0, %c0_i32, %c0_i32_0, %c0_i32_1 : i32, i32, i32, i32
  }
  func.func @transform_1(%arg0: i32, %arg1: i32) -> (i32, i32, i32) {
    %c0_i32 = arith.constant 0 : i32
    %c0_i32_0 = arith.constant 0 : i32
    %c0_i32_1 = arith.constant 0 : i32
    return %c0_i32, %c0_i32_0, %arg1 : i32, i32, i32
  }
  func.func @transform_2(%arg0: i32, %arg1: i32) -> (i32, i32) {
    %c0_i32 = arith.constant 0 : i32
    %c0_i32_0 = arith.constant 0 : i32
    return %c0_i32, %arg1 : i32, i32
  }
  func.func @transform_3(%arg0: i32, %arg1: i32) -> (i32, i32, i32) {
    %c0_i32 = arith.constant 0 : i32
    %c0_i32_0 = arith.constant 0 : i32
    return %arg0, %c0_i32, %arg1 : i32, i32, i32
  }
  func.func @transform_4(%arg0: i32, %arg1: i32) -> (i32, i32, i32) {
    %c0_i32 = arith.constant 0 : i32
    %c0_i32_0 = arith.constant 0 : i32
    return %arg0, %c0_i32, %arg1 : i32, i32, i32
  }
}

</mosaic_0001>

<llo_original>
// kernel: tpu_custom_call.1
$region0: #{tpu_custom_call.1}
  #allocation0 [shape = 'u32[]', space=smem, size = 0x4, offset = 0x4, fixed_abs, tag = 'smem constant byte address 0x4 - core index']
  #allocation1 [shape = 'u32[144,128]{1,0:T(1,128)}', space=vmem, size = 0x12000, scoped, tag = 'internal scratch']
  %s0 = inlined_call_operand.hbm [shape: bf16[2,1,64,64], index: 0, kind: input, shape index: {}]
  %s1 = inlined_call_operand.hbm [shape: bf16[1,64,128], index: 1, kind: input, shape index: {}]
  %s2 = inlined_call_operand.vmem [shape: f32[1,128], index: 2, kind: input, shape index: {}]
  %s3 = inlined_call_operand.hbm [shape: bf16[2,64,128], index: 3, kind: input, shape index: {}]
  %s4 = inlined_call_operand.hbm [shape: bf16[2,64,128], index: 4, kind: output, shape index: {}]
  %s5 = sld [smem:[#allocation0]]
  $region61: #{tpu_custom_call.1} parent=0
    _
  %s7 = ssub.s32 1, %s5
  %s8 = scalar_select 0, %s7, %s5
  $region1: #{tpu_custom_call.1} parent=0
    #allocation2 [shape = 'u8[32768]{0}', space=vmem, size = 0x8000, scoped, tag = 'input window, operand 0']
    #allocation3 [shape = 's32[2]{0}', space=sflag, size = 0x8, scoped, tag = 'scoped memory for tpu_custom_call.1']
    #allocation4 [shape = 's32[2]{0}', space=sflag, size = 0x8, scoped, tag = 'scoped memory for tpu_custom_call.1']
    #allocation5 [shape = 'u8[16384]{0}', space=vmem, size = 0x4000, scoped, tag = 'input window, operand 1, single buffered']
    #allocation6 [shape = 's32[1]{0}', space=sflag, size = 0x4, scoped, tag = 'scoped memory for tpu_custom_call.1']
    #allocation7 [shape = 'u8[32768]{0}', space=vmem, size = 0x8000, scoped, tag = 'input window, operand 3']
    #allocation8 [shape = 'u8[32768]{0}', space=vmem, size = 0x8000, scoped, tag = 'output window, operand 0']
    %9 = vsyncpa [#allocation3], 0
    %s10 = scalar_lea.sflag [#allocation3], 1
    %11 = vsyncpa %s10, 0
    %12 = vsyncpa [#allocation6], 0
    %13 = vsyncpa [#allocation4], 0
    %s14 = scalar_lea.sflag [#allocation4], 1
    %15 = vsyncpa %s14, 0
    loop: start=0, step=1, limit=4
    $region2: #{tpu_custom_call.1} parent=1 // loop_pre_header
      _
    $region3: #{tpu_custom_call.1} parent=1 // loop_header
      %s17 = sphi 0, %s21
      %p18 = scmp.ge.s32.totalorder %s17, 4
      %s24 = sphi 0, %s36
      %s25 = sphi 0, %s32
      %s26 = sphi 0, %s24
      %s27 = sphi 0, %s25
      %s28 = sphi 0, %s26
      %s29 = sphi 0, %s27
      %s39 = sphi 0, %s41
      %s42 = sphi 0, %s39
      %s43 = sphi 0, %s42
      %s59 = sphi 0, %s43
      %s65 = sphi 0, %s67
      %s68 = sphi 0, %s65
      %s69 = sphi 0, %s68
      %s85 = sphi 0, %s69
      %s91 = sphi 0, %s93
      %s94 = sphi 0, %s91
      %s95 = sphi 0, %s94
      %s111 = sphi 0, %s95
      %s119 = sphi 0, %s121
      %s122 = sphi 0, %s119
      %s123 = sphi 0, %s122
      %s139 = sphi 0, %s123
      %s147 = sphi 0, %s149
      %s150 = sphi 0, %s147
      %s151 = sphi 0, %s150
      %s167 = sphi 0, %s151
    $region4: #{tpu_custom_call.1} parent=1 // loop_header_branch
      %20 = sbr.rel (%p18) target = $region8
    $region5: #{tpu_custom_call.1} parent=1 // loop_body
      %s22 = ssub.s32 %s17, 1
      %s23 = ssub.s32 %s17, 2
      %s30 = sadd.s32 1, %s25
      %p31 = scmp.ge.s32.totalorder %s30, 1
      %s32 = scalar_select %p31, 0, %s30
      %s33 = sadd.s32 1, %s24
      %s34 = scalar_select %p31, %s33, %s24
      %p35 = scmp.ge.s32.totalorder %s34, 2
      %s36 = scalar_select %p35, 0, %s34
      %s37 = ssub.s32 %s24, %s36
      %p38 = scmp.eq.s32.totalorder %s37, 0
      %s40 = sadd.s32 %s39, 1
      %s41 = scalar_select %p38, %s39, %s40
      %p44 = pneg %p38
      %p45 = scmp.eq.s32.totalorder %s17, 1
      %p46 = por %p44, %p45
      %p47 = scmp.ne.s32.totalorder %s39, %s42
      %p48 = scmp.eq.s32.totalorder %s17, 0
      %p49 = por %p47, %p48
      %p50 = scmp.ne.s32.totalorder %s39, %s42
      %p51 = scmp.eq.s32.totalorder %s22, 1
      %p52 = por %p50, %p51
      %p53 = scmp.ne.s32.totalorder %s42, %s43
      %p54 = scmp.eq.s32.totalorder %s22, 0
      %p55 = por %p53, %p54
      %p56 = scmp.ne.s32.totalorder %s42, %s43
      %p57 = scmp.eq.s32.totalorder %s23, 1
      %p58 = por %p56, %p57
      %p60 = scmp.ne.s32.totalorder %s43, %s59
      %p61 = scmp.eq.s32.totalorder %s23, 0
      %p62 = por %p60, %p61
      %s63 = ssub.s32 %s25, %s32
      %p64 = scmp.eq.s32.totalorder %s63, 0
      %s66 = sadd.s32 %s65, 1
      %s67 = scalar_select %p64, %s65, %s66
      %p70 = pneg %p64
      %p71 = scmp.eq.s32.totalorder %s17, 1
      %p72 = por %p70, %p71
      %p73 = scmp.ne.s32.totalorder %s65, %s68
      %p74 = scmp.eq.s32.totalorder %s17, 0
      %p75 = por %p73, %p74
      %p76 = scmp.ne.s32.totalorder %s65, %s68
      %p77 = scmp.eq.s32.totalorder %s22, 1
      %p78 = por %p76, %p77
      %p79 = scmp.ne.s32.totalorder %s68, %s69
      %p80 = scmp.eq.s32.totalorder %s22, 0
      %p81 = por %p79, %p80
      %p82 = scmp.ne.s32.totalorder %s68, %s69
      %p83 = scmp.eq.s32.totalorder %s23, 1
      %p84 = por %p82, %p83
      %p86 = scmp.ne.s32.totalorder %s69, %s85
      %p87 = scmp.eq.s32.totalorder %s23, 0
      %p88 = por %p86, %p87
      %s89 = ssub.s32 %s25, %s32
      %p90 = scmp.eq.s32.totalorder %s89, 0
      %s92 = sadd.s32 %s91, 1
      %s93 = scalar_select %p90, %s91, %s92
      %p96 = pneg %p90
      %p97 = scmp.eq.s32.totalorder %s17, 1
      %p98 = por %p96, %p97
      %p99 = scmp.ne.s32.totalorder %s91, %s94
      %p100 = scmp.eq.s32.totalorder %s17, 0
      %p101 = por %p99, %p100
      %p102 = scmp.ne.s32.totalorder %s91, %s94
      %p103 = scmp.eq.s32.totalorder %s22, 1
      %p104 = por %p102, %p103
      %p105 = scmp.ne.s32.totalorder %s94, %s95
      %p106 = scmp.eq.s32.totalorder %s22, 0
      %p107 = por %p105, %p106
      %p108 = scmp.ne.s32.totalorder %s94, %s95
      %p109 = scmp.eq.s32.totalorder %s23, 1
      %p110 = por %p108, %p109
      %p112 = scmp.ne.s32.totalorder %s95, %s111
      %p113 = scmp.eq.s32.totalorder %s23, 0
      %p114 = por %p112, %p113
      %s115 = ssub.s32 %s24, %s36
      %s116 = ssub.s32 %s25, %s32
      %s117 = sor.u32 %s115, %s116
      %p118 = scmp.eq.s32.totalorder %s117, 0
      %s120 = sadd.s32 %s119, 1
      %s121 = scalar_select %p118, %s119, %s120
      %p124 = pneg %p118
      %p125 = scmp.eq.s32.totalorder %s17, 1
      %p126 = por %p124, %p125
      %p127 = scmp.ne.s32.totalorder %s119, %s122
      %p128 = scmp.eq.s32.totalorder %s17, 0
      %p129 = por %p127, %p128
      %p130 = scmp.ne.s32.totalorder %s119, %s122
      %p131 = scmp.eq.s32.totalorder %s22, 1
      %p132 = por %p130, %p131
      %p133 = scmp.ne.s32.totalorder %s122, %s123
      %p134 = scmp.eq.s32.totalorder %s22, 0
      %p135 = por %p133, %p134
      %p136 = scmp.ne.s32.totalorder %s122, %s123
      %p137 = scmp.eq.s32.totalorder %s23, 1
      %p138 = por %p136, %p137
      %p140 = scmp.ne.s32.totalorder %s123, %s139
      %p141 = scmp.eq.s32.totalorder %s23, 0
      %p142 = por %p140, %p141
      %s143 = ssub.s32 %s24, %s36
      %s144 = ssub.s32 %s25, %s32
      %s145 = sor.u32 %s143, %s144
      %p146 = scmp.eq.s32.totalorder %s145, 0
      %s148 = sadd.s32 %s147, 1
      %s149 = scalar_select %p146, %s147, %s148
      %p152 = pneg %p146
      %p153 = scmp.eq.s32.totalorder %s17, 1
      %p154 = por %p152, %p153
      %p155 = scmp.ne.s32.totalorder %s147, %s150
      %p156 = scmp.eq.s32.totalorder %s17, 0
      %p157 = por %p155, %p156
      %p158 = scmp.ne.s32.totalorder %s147, %s150
      %p159 = scmp.eq.s32.totalorder %s22, 1
      %p160 = por %p158, %p159
      %p161 = scmp.ne.s32.totalorder %s150, %s151
      %p162 = scmp.eq.s32.totalorder %s22, 0
      %p163 = por %p161, %p162
      %p164 = scmp.ne.s32.totalorder %s150, %s151
      %p165 = scmp.eq.s32.totalorder %s23, 1
      %p166 = por %p164, %p165
      %p168 = scmp.ne.s32.totalorder %s151, %s167
      %p169 = scmp.eq.s32.totalorder %s23, 0
      %p170 = por %p168, %p169
      %p171 = scmp.le.s32.totalorder 1, %s17
      %p172 = scmp.lt.s32.totalorder %s17, 3
      %p173 = pnand %p171, %p172
      %p174 = pneg %p173
      // Predicated region
      $region9: #{tpu_custom_call.1} parent=5 // pred_check
        _
      $region10: #{tpu_custom_call.1} parent=5 // pred_check_branch
        %176 = sbr.rel (%p173) target = $region12
      $region11: #{tpu_custom_call.1} parent=5 // pred_region
        %s177 = ssub.s32 %s17, 1
        // Predicated region
        $region13: #{tpu_custom_call.1} parent=11 // pred_check
          %p178 = pneg %p81
        $region14: #{tpu_custom_call.1} parent=11 // pred_check_branch
          %180 = sbr.rel (%p178) target = $region16
        $region15: #{tpu_custom_call.1} parent=11 // pred_region
          %s182 = ssub.s32 512, 512
          %183 = vsyncadd [#allocation6], %s182
          %s184 = smul.addr %s27, 64
          %s185 = scalar_lea.hbm %s1, %s184
          %s186 = sshll.u32 [#allocation5], 4
          %s187 = int_to_ptr.vmem [resolvable:$true] %s186
          %192 = dma.hbm_to_vmem [thread:$0]  %s185, 512, %s187, [#allocation6], 64, 64, 4
        $region16: #{tpu_custom_call.1} parent=11 // pred_fallthru
          _
        // Predicated region
        $region17: #{tpu_custom_call.1} parent=11 // pred_check
          %p193 = pneg %p107
        $region18: #{tpu_custom_call.1} parent=11 // pred_check_branch
          %195 = sbr.rel (%p193) target = $region20
        $region19: #{tpu_custom_call.1} parent=11 // pred_region
          %p196 = scmp.lt.s32.totalorder %s27, 0
          %s197 = scalar_select %p196, %s27, 0
          %s198 = scalar_lea.vmem %s2, %s197
        $region20: #{tpu_custom_call.1} parent=11 // pred_fallthru
          _
      $region12: #{tpu_custom_call.1} parent=5 // pred_fallthru
        _
      %p199 = scmp.lt.s32.totalorder %s17, 2
      // Predicated region
      $region21: #{tpu_custom_call.1} parent=5 // pred_check
        %p200 = pneg %p199
      $region22: #{tpu_custom_call.1} parent=5 // pred_check_branch
        %202 = sbr.rel (%p200) target = $region24
      $region23: #{tpu_custom_call.1} parent=5 // pred_region
        // Predicated region
        $region25: #{tpu_custom_call.1} parent=23 // pred_check
          %p203 = pneg %p49
        $region26: #{tpu_custom_call.1} parent=23 // pred_check_branch
          %205 = sbr.rel (%p203) target = $region28
        $region27: #{tpu_custom_call.1} parent=23 // pred_region
          %s206 = sand.u32 %s17, 1
          %s207 = scalar_lea.sflag [#allocation3], %s206
          %s208 = sand.u32 %s39, 1
          %s209 = smul.addr %s208, 32
          %s210 = scalar_lea.vmem [#allocation2], %s209
          %s212 = ssub.s32 512, 512
          %213 = vsyncadd %s207, %s212
          %s214 = smul.addr %s24, 8
          %s215 = smul.addr %s214, 64
          %s216 = scalar_lea.hbm %s0, %s215
          %s217 = sshll.u32 %s210, 4
          %s218 = int_to_ptr.vmem [resolvable:$true] %s217
          %223 = dma.hbm_to_vmem [thread:$0]  %s216, 512, %s218, %s207, 64, 64, 4
        $region28: #{tpu_custom_call.1} parent=23 // pred_fallthru
          _
        // Predicated region
        $region29: #{tpu_custom_call.1} parent=23 // pred_check
          %p224 = pneg %p129
        $region30: #{tpu_custom_call.1} parent=23 // pred_check_branch
          %226 = sbr.rel (%p224) target = $region32
        $region31: #{tpu_custom_call.1} parent=23 // pred_region
          %s227 = sand.u32 %s17, 1
          %s228 = scalar_lea.sflag [#allocation3], %s227
          %s229 = sand.u32 %s119, 1
          %s230 = smul.addr %s229, 32
          %s231 = scalar_lea.vmem [#allocation7], %s230
          %s233 = ssub.s32 512, 512
          %234 = vsyncadd %s228, %s233
          %s235 = smul.addr %s24, 8
          %s236 = sadd.s32 %s25, %s235
          %s237 = smul.addr %s236, 64
          %s238 = scalar_lea.hbm %s3, %s237
          %s239 = sshll.u32 %s231, 4
          %s240 = int_to_ptr.vmem [resolvable:$true] %s239
          %245 = dma.hbm_to_vmem [thread:$0]  %s238, 512, %s240, %s228, 64, 64, 4
        $region32: #{tpu_custom_call.1} parent=23 // pred_fallthru
          _
      $region24: #{tpu_custom_call.1} parent=5 // pred_fallthru
        _
      %p246 = scmp.le.s32.totalorder 1, %s17
      %p247 = scmp.lt.s32.totalorder %s17, 3
      %p248 = pnand %p246, %p247
      %p249 = pneg %p248
      // Predicated region
      $region33: #{tpu_custom_call.1} parent=5 // pred_check
        _
      $region34: #{tpu_custom_call.1} parent=5 // pred_check_branch
        %251 = sbr.rel (%p248) target = $region36
      $region35: #{tpu_custom_call.1} parent=5 // pred_region
        %s252 = ssub.s32 %s17, 1
        %s253 = sand.u32 %s22, 1
        %s254 = scalar_lea.sflag [#allocation3], %s253
        %s255 = sand.u32 %s42, 1
        %s256 = smul.addr %s255, 32
        %s257 = scalar_lea.vmem [#allocation2], %s256
        // Predicated region
        $region37: #{tpu_custom_call.1} parent=35 // pred_check
          %p258 = pneg %p55
        $region38: #{tpu_custom_call.1} parent=35 // pred_check_branch
          %260 = sbr.rel (%p258) target = $region40
        $region39: #{tpu_custom_call.1} parent=35 // pred_region
          %261 = dma.done %s254, 512
        $region40: #{tpu_custom_call.1} parent=35 // pred_fallthru
          _
        // Predicated region
        $region41: #{tpu_custom_call.1} parent=35 // pred_check
          %p262 = pneg %p81
        $region42: #{tpu_custom_call.1} parent=35 // pred_check_branch
          %264 = sbr.rel (%p262) target = $region44
        $region43: #{tpu_custom_call.1} parent=35 // pred_region
          %265 = dma.done [#allocation6], 512
        $region44: #{tpu_custom_call.1} parent=35 // pred_fallthru
          _
        %s266 = sand.u32 %s22, 1
        %s267 = scalar_lea.sflag [#allocation3], %s266
        %s268 = sand.u32 %s122, 1
        %s269 = smul.addr %s268, 32
        %s270 = scalar_lea.vmem [#allocation7], %s269
        // Predicated region
        $region45: #{tpu_custom_call.1} parent=35 // pred_check
          %p271 = pneg %p135
        $region46: #{tpu_custom_call.1} parent=35 // pred_check_branch
          %273 = sbr.rel (%p271) target = $region48
        $region47: #{tpu_custom_call.1} parent=35 // pred_region
          %274 = dma.done %s267, 512
        $region48: #{tpu_custom_call.1} parent=35 // pred_fallthru
          _
        %s275 = sand.u32 %s22, 1
        %s276 = scalar_lea.sflag [#allocation3], %s275
        %s277 = sand.u32 %s42, 1
        %s278 = smul.addr %s277, 32
        %s279 = scalar_lea.vmem [#allocation2], %s278
        %p280 = pneg %p55
        %p281 = pneg %p52
        %p282 = pneg %p81
        %p283 = pneg %p78
        %p284 = scmp.lt.s32.totalorder %s27, 0
        %s285 = scalar_select %p284, %s27, 0
        %s286 = scalar_lea.vmem %s2, %s285
        %p287 = pneg %p107
        %p288 = pneg %p104
        %s289 = sand.u32 %s22, 1
        %s290 = scalar_lea.sflag [#allocation3], %s289
        %s291 = sand.u32 %s122, 1
        %s292 = smul.addr %s291, 32
        %s293 = scalar_lea.vmem [#allocation7], %s292
        %p294 = pneg %p135
        %p295 = pneg %p132
        %p296 = pneg %p163
        %p297 = pneg %p160
        %s298 = sand.u32 %s150, 1
        %s299 = scalar_lea.sflag [#allocation4], %s298
        %s300 = sand.u32 %s150, 1
        %s301 = smul.addr %s300, 32
        %s302 = scalar_lea.vmem [#allocation8], %s301
        %p303 = scmp.lt.s32.totalorder %s27, 0
        %s304 = scalar_select %p303, %s27, 0
        %s305 = scalar_lea.vmem %s2, %s304
        %v307 = vld [vmem:[%s257] sm:$0xf]
        %v308 = vld [vmem:[%s257 + $0x4] sm:$0xf]
        %v309 = vld [vmem:[%s257 + $0x8] sm:$0xf]
        %v310 = vld [vmem:[%s257 + $0xc] sm:$0xf]
        %v311 = vld [vmem:[%s257 + $0x10] sm:$0xf]
        %v312 = vld [vmem:[%s257 + $0x14] sm:$0xf]
        %v313 = vld [vmem:[%s257 + $0x18] sm:$0xf]
        %v314 = vld [vmem:[%s257 + $0x1c] sm:$0xf]
        %v315 = vld [vmem:[#allocation5] sm:$0xf]
        %v316 = vld [vmem:[#allocation5 + $0x4] sm:$0xf]
        %v317 = vld [vmem:[#allocation5 + $0x8] sm:$0xf]
        %v318 = vld [vmem:[#allocation5 + $0xc] sm:$0xf]
        %v319 = vld [vmem:[#allocation5 + $0x10] sm:$0xf]
        %v320 = vld [vmem:[#allocation5 + $0x14] sm:$0xf]
        %v321 = vld [vmem:[#allocation5 + $0x18] sm:$0xf]
        %v322 = vld [vmem:[#allocation5 + $0x1c] sm:$0xf]
        %v323 = vld [vmem:[%s305] sm:$0x1]
        %v325 = vlaneseq
        %v326 = vshrl.u32 %v325, 7
        %v327 = vsub.s32 0, %v326
        %v328 = vrot.slane %v323, %v327
        %v338 = vunpack.c.l.b16 %v307
        %v339 = vunpack.c.l.b16 %v308
        %v340 = vunpack.c.l.b16 %v309
        %v341 = vunpack.c.l.b16 %v310
        %v342 = vunpack.c.l.b16 %v311
        %v343 = vunpack.c.l.b16 %v312
        %v344 = vunpack.c.l.b16 %v313
        %v345 = vunpack.c.l.b16 %v314
        %v346 = vpack.c.b16 %v339, %v338
        %v347 = vpack.c.b16 %v341, %v340
        %v348 = vpack.c.b16 %v343, %v342
        %v349 = vpack.c.b16 %v345, %v344
        %v358 = vunpack.c.l.b16 %v315
        %v359 = vunpack.c.l.b16 %v316
        %v360 = vunpack.c.l.b16 %v317
        %v361 = vunpack.c.l.b16 %v318
        %v362 = vunpack.c.l.b16 %v319
        %v363 = vunpack.c.l.b16 %v320
        %v364 = vunpack.c.l.b16 %v321
        %v365 = vunpack.c.l.b16 %v322
        %v366 = vpack.c.b16 %v359, %v358
        %v367 = vpack.c.b16 %v361, %v360
        %v368 = vpack.c.b16 %v363, %v362
        %v369 = vpack.c.b16 %v365, %v364
        %vm374 = vcmask 523264
        %v376 = vsel %vm374, %v346, 0
        %v379 = vsel %vm374, %v347, 0
        %v382 = vsel %vm374, %v348, 0
        %v385 = vsel %vm374, %v349, 0
        %387 = vmatprep.subr.bf16.mxu0 0
        %388 = vmatpush1.bf16.msra.mxu0 %v366
        %389 = vmatprep.subr.bf16.mxu0 0
        %390 = vmatpush1.bf16.msra.mxu0 %v367
        %391 = vmatprep.subr.bf16.mxu0 0
        %392 = vmatpush1.bf16.msra.mxu0 %v368
        %393 = vmatprep.subr.bf16.mxu0 0
        %394 = vmatpush1.bf16.msra.mxu0 %v369
        %395 = vmatprep.subr.bf16.mxu0 0
        %396 = vmatpush1.bf16.msra.mxu0 0
        %397 = vmatprep.subr.bf16.mxu0 0
        %398 = vmatpush1.bf16.msra.mxu0 0
        %399 = vmatprep.subr.bf16.mxu0 0
        %400 = vmatpush1.bf16.msra.mxu0 0
        %401 = vmatprep.subr.bf16.mxu0 0
        %402 = vmatpush1.bf16.msra.mxu0 0
        %403 = vmatprep.subr.bf16.mxu0 0
        %404 = vmatpush1.bf16.msra.mxu0 0
        %405 = vmatprep.subr.bf16.mxu0 0
        %406 = vmatpush1.bf16.msra.mxu0 0
        %407 = vmatprep.subr.bf16.mxu0 0
        %408 = vmatpush1.bf16.msra.mxu0 0
        %409 = vmatprep.subr.bf16.mxu0 0
        %410 = vmatpush1.bf16.msra.mxu0 0
        %411 = vmatprep.subr.bf16.mxu0 0
        %412 = vmatpush1.bf16.msra.mxu0 0
        %413 = vmatprep.subr.bf16.mxu0 0
        %414 = vmatpush1.bf16.msra.mxu0 0
        %415 = vmatprep.subr.bf16.mxu0 0
        %416 = vmatpush1.bf16.msra.mxu0 0
        %417 = vmatprep.subr.bf16.mxu0 0
        %418 = vmatpush1.bf16.msra.mxu0 0
        %419 = vmatprep.mubr.bf16.mxu0 0
        %420 = vmatmul.mubr.bf16.gmra.mrb[0].mxu0 %v376
        %v421 = vpop.f32.mrb[0].mxu0
        %v422 = vadd.f32 %v328, %v421
        %v423 = vpop.f32.mrb[0].mxu0
        %v424 = vpop.f32.mrb[0].mxu0
        %v425 = vadd.f32 %v328, %v424
        %v426 = vpop.f32.mrb[0].mxu0
        %427 = vmatprep.mubr.bf16.mxu0 0
        %428 = vmatmul.mubr.bf16.gmra.mrb[0].mxu0 %v379
        %v429 = vpop.f32.mrb[0].mxu0
        %v430 = vadd.f32 %v328, %v429
        %v431 = vpop.f32.mrb[0].mxu0
        %v432 = vpop.f32.mrb[0].mxu0
        %v433 = vadd.f32 %v328, %v432
        %v434 = vpop.f32.mrb[0].mxu0
        %435 = vmatprep.mubr.bf16.mxu0 0
        %436 = vmatmul.mubr.bf16.gmra.mrb[0].mxu0 %v382
        %v437 = vpop.f32.mrb[0].mxu0
        %v438 = vadd.f32 %v328, %v437
        %v439 = vpop.f32.mrb[0].mxu0
        %v440 = vpop.f32.mrb[0].mxu0
        %v441 = vadd.f32 %v328, %v440
        %v442 = vpop.f32.mrb[0].mxu0
        %443 = vmatprep.mubr.bf16.mxu0 0
        %444 = vmatmul.mubr.bf16.gmra.mrb[0].mxu0 %v385
        %v445 = vpop.f32.mrb[0].mxu0
        %v446 = vadd.f32 %v328, %v445
        %v447 = vpop.f32.mrb[0].mxu0
        %v448 = vpop.f32.mrb[0].mxu0
        %v449 = vadd.f32 %v328, %v448
        %v450 = vpop.f32.mrb[0].mxu0
        %451 = vdwg.mxu0
        %v452 = vld [vmem:[%s270] sm:$0xf]
        %v453 = vld [vmem:[%s270 + $0x4] sm:$0xf]
        %v454 = vld [vmem:[%s270 + $0x8] sm:$0xf]
        %v455 = vld [vmem:[%s270 + $0xc] sm:$0xf]
        %v456 = vld [vmem:[%s270 + $0x10] sm:$0xf]
        %v457 = vld [vmem:[%s270 + $0x14] sm:$0xf]
        %v458 = vld [vmem:[%s270 + $0x18] sm:$0xf]
        %v459 = vld [vmem:[%s270 + $0x1c] sm:$0xf]
        %v460 = vunpack.c.l.bf16 %v452
        %v461 = vunpack.c.l.bf16 %v453
        %v462 = vunpack.c.l.bf16 %v454
        %v463 = vunpack.c.l.bf16 %v455
        %v464 = vunpack.c.l.bf16 %v456
        %v465 = vunpack.c.l.bf16 %v457
        %v466 = vunpack.c.l.bf16 %v458
        %v467 = vunpack.c.l.bf16 %v459
        %v468 = vadd.f32 %v422, %v460
        %v469 = vadd.f32 %v425, %v461
        %v470 = vadd.f32 %v430, %v462
        %v471 = vadd.f32 %v433, %v463
        %v472 = vadd.f32 %v438, %v464
        %v473 = vadd.f32 %v441, %v465
        %v474 = vadd.f32 %v446, %v466
        %v475 = vadd.f32 %v449, %v467
        %v476 = vmax.f32 %v468, 0.0
        %v477 = vmax.f32 %v469, 0.0
        %v478 = vmax.f32 %v470, 0.0
        %v479 = vmax.f32 %v471, 0.0
        %v480 = vmax.f32 %v472, 0.0
        %v481 = vmax.f32 %v473, 0.0
        %v482 = vmax.f32 %v474, 0.0
        %v483 = vmax.f32 %v475, 0.0
        %v484 = vpack.c.bf16 %v477, %v476
        %v485 = vpack.c.bf16 %v479, %v478
        %v486 = vpack.c.bf16 %v481, %v480
        %v487 = vpack.c.bf16 %v483, %v482
        %v492 = vunpack.c.l.b16 %v484
        %v493 = vunpack.c.h.b16 %v484
        %v494 = vunpack.c.l.b16 %v485
        %v495 = vunpack.c.h.b16 %v485
        %v496 = vunpack.c.l.b16 %v486
        %v497 = vunpack.c.h.b16 %v486
        %v498 = vunpack.c.l.b16 %v487
        %v499 = vunpack.c.h.b16 %v487
        %v500 = vpack.c.b16 %v492, %v492
        %v501 = vpack.c.b16 %v493, %v493
        %v502 = vpack.c.b16 %v494, %v494
        %v503 = vpack.c.b16 %v495, %v495
        %v504 = vpack.c.b16 %v496, %v496
        %v505 = vpack.c.b16 %v497, %v497
        %v506 = vpack.c.b16 %v498, %v498
        %v507 = vpack.c.b16 %v499, %v499
        %516 = vst [vmem:[%s302] sm:$0xf] %v500
        %517 = vst [vmem:[%s302 + $0x4] sm:$0xf] %v501
        %518 = vst [vmem:[%s302 + $0x8] sm:$0xf] %v502
        %519 = vst [vmem:[%s302 + $0xc] sm:$0xf] %v503
        %520 = vst [vmem:[%s302 + $0x10] sm:$0xf] %v504
        %521 = vst [vmem:[%s302 + $0x14] sm:$0xf] %v505
        %522 = vst [vmem:[%s302 + $0x18] sm:$0xf] %v506
        %523 = vst [vmem:[%s302 + $0x1c] sm:$0xf] %v507
        %s524 = sand.u32 %s150, 1
        %s525 = scalar_lea.sflag [#allocation4], %s524
        %s526 = sand.u32 %s150, 1
        %s527 = smul.addr %s526, 32
        %s528 = scalar_lea.vmem [#allocation8], %s527
        // Predicated region
        $region49: #{tpu_custom_call.1} parent=35 // pred_check
          %p529 = pneg %p160
        $region50: #{tpu_custom_call.1} parent=35 // pred_check_branch
          %531 = sbr.rel (%p529) target = $region52
        $region51: #{tpu_custom_call.1} parent=35 // pred_region
          %s533 = ssub.s32 512, 512
          %534 = vsyncadd %s525, %s533
          %s535 = smul.addr %s26, 8
          %s536 = sadd.s32 %s27, %s535
          %s537 = smul.addr %s536, 64
          %s538 = scalar_lea.hbm %s4, %s537
          %s539 = sshll.u32 %s528, 4
          %s540 = int_to_ptr.vmem [resolvable:$true] %s539
          %545 = dma.vmem_to_hbm [thread:$0]  %s540, 512, %s538, %s525, 64, 64, 4
        $region52: #{tpu_custom_call.1} parent=35 // pred_fallthru
          _
      $region36: #{tpu_custom_call.1} parent=5 // pred_fallthru
        _
      %p546 = scmp.le.s32.totalorder 2, %s17
      // Predicated region
      $region53: #{tpu_custom_call.1} parent=5 // pred_check
        %p547 = pneg %p546
      $region54: #{tpu_custom_call.1} parent=5 // pred_check_branch
        %549 = sbr.rel (%p547) target = $region56
      $region55: #{tpu_custom_call.1} parent=5 // pred_region
        %s550 = ssub.s32 %s17, 2
        // Predicated region
        $region57: #{tpu_custom_call.1} parent=55 // pred_check
          %p551 = pneg %p166
        $region58: #{tpu_custom_call.1} parent=55 // pred_check_branch
          %553 = sbr.rel (%p551) target = $region60
        $region59: #{tpu_custom_call.1} parent=55 // pred_region
          %s554 = sand.u32 %s151, 1
          %s555 = scalar_lea.sflag [#allocation4], %s554
          %s556 = sand.u32 %s151, 1
          %s557 = smul.addr %s556, 32
          %s558 = scalar_lea.vmem [#allocation8], %s557
          %559 = dma.done %s555, 512
        $region60: #{tpu_custom_call.1} parent=55 // pred_fallthru
          _
      $region56: #{tpu_custom_call.1} parent=5 // pred_fallthru
        _
    $region6: #{tpu_custom_call.1} parent=1 // loop_footer
      %s21 = sadd.s32 1, %s17
    $region7: #{tpu_custom_call.1} parent=1 // loop_footer_branch
      %16 = sbr.rel target = $region3
    $region8: #{tpu_custom_call.1} parent=1 // loop_exit
      _
    %560 = vsyncpa [#allocation3], 1
    %s561 = scalar_lea.sflag [#allocation3], 1
    %562 = vsyncpa %s561, 1
    %563 = vsyncpa [#allocation6], 1
    %564 = vsyncpa [#allocation4], 1
    %s565 = scalar_lea.sflag [#allocation4], 1
    %566 = vsyncpa %s565, 1

</llo_original>
